<compile_context>
chip_gen: v6e
topology: v6e:2x2x1
jax: 0.10.0
libtpu: 0.0.40
codegen_flags: <defaults>
</compile_context>

<pallas_src>
import jax
import jax.numpy as jnp
from jax.experimental import pallas as pl
from jax.experimental.pallas import tpu as pltpu


def cross_1x1_kernel(x_ref, y_ref, w1x_ref, w1y_ref, w2x_ref, w2y_ref,
                     o1_ref, o2_ref):
    """Fused conv1/conv2 on concat(x, y) for one spatial tile.

    x_ref, y_ref        : (1, Cin, T)   input tiles (spatial on lanes)
    w{1,2}{x,y}_ref     : (Cout, Cin)   per-conv weight halves (VMEM-resident)
    o1_ref, o2_ref      : (1, Cout, T)  lane-dense output tiles
    """
    x = x_ref[0]                       # (Cin, T)
    y = y_ref[0]                       # (Cin, T)

    # conv(cat(x, y)) == Wx @ x + Wy @ y ; f32 accumulation on the MXU.
    acc1 = jnp.dot(w1x_ref[...], x, preferred_element_type=jnp.float32)
    acc1 = acc1 + jnp.dot(w1y_ref[...], y, preferred_element_type=jnp.float32)
    o1_ref[0] = jnp.maximum(acc1, 0.0).astype(o1_ref.dtype)   # ReLU in f32

    acc2 = jnp.dot(w2x_ref[...], x, preferred_element_type=jnp.float32)
    acc2 = acc2 + jnp.dot(w2y_ref[...], y, preferred_element_type=jnp.float32)
    o2_ref[0] = jnp.maximum(acc2, 0.0).astype(o2_ref.dtype)


def _round_up(v, m):
    return -(-v // m) * m


def _largest_tile_divisor(m, cap_d):
    """Largest divisor of m that is <= cap_d (m = HW_padded / 128)."""
    best = 1
    for d in range(1, min(m, cap_d) + 1):
        if m % d == 0:
            best = d
    return best


def _pick_spatial_tile(hw_pad, n_batch, cin_p, cout_p,
                       block_budget_bytes=24 << 20, lane_cap=32768):
    """Largest multiple-of-128 divisor of hw_pad that keeps the double-buffered
    input+output blocks inside `block_budget_bytes` (conservative f32-padded
    byte estimate), capped at `lane_cap` lanes, with >= 2 total grid steps when
    possible so both v7x TensorCores get work."""
    m = hw_pad // 128
    per_lane_bytes = 2 * (2 * cin_p + 2 * cout_p) * 4     # 2x double-buffered
    cap_lanes = max(128, min(lane_cap, block_budget_bytes // per_lane_bytes))
    cap_d = max(1, cap_lanes // 128)
    d = _largest_tile_divisor(m, cap_d)
    if n_batch * (m // d) < 2 and m >= 2:                  # v7x: 2 TCs/chip
        d = _largest_tile_divisor(m, max(1, min(cap_d, m // 2)))
    return 128 * d


def basic_cross_block(x, y, w1x, w1y, w2x, w2y):
    """x, y: (N, Cin, H, W) NCHW; w{1,2}{x,y}: (Cout, Cin) 1x1-conv halves."""
    N, Cin, H, W = x.shape
    Cout = w1x.shape[0]
    HW = H * W
    HWp = _round_up(HW, 128)

    # Free (contiguous) reshape: merge H, W onto the lane axis.
    xf = x.reshape(N, Cin, HW)
    yf = y.reshape(N, Cin, HW)
    if HWp != HW:
        # Pad to a multiple of 128 lanes so tiles stay (8,128)-aligned and
        # double-buffered on all generations (avoids v7x full-extent VMEM OOM).
        pad = ((0, 0), (0, 0), (0, HWp - HW))
        xf = jnp.pad(xf, pad)
        yf = jnp.pad(yf, pad)

    cin_p = _round_up(Cin, 8)
    cout_p = _round_up(Cout, 8)
    T = _pick_spatial_tile(HWp, N, cin_p, cout_p)
    grid = (N, HWp // T)

    # MXU operand dtype follows the activations (bf16 in -> bf16 operands);
    # accumulation stays f32 inside the kernel.
    wdt = x.dtype
    w1x = w1x.astype(wdt)
    w1y = w1y.astype(wdt)
    w2x = w2x.astype(wdt)
    w2y = w2y.astype(wdt)

    # Scoped-VMEM limit: actual double-buffered block bytes + headroom, capped
    # at 48 MiB so it stays inside v7x's 64 MiB physical VMEM.
    blk_bytes = 2 * (2 * cin_p + 2 * cout_p) * T * 4
    vmem_limit = int(min(48 << 20, max(16 << 20, blk_bytes + (4 << 20))))

    in_spec = pl.BlockSpec((1, Cin, T), lambda n, s: (n, 0, s))
    w_spec = pl.BlockSpec((Cout, Cin), lambda n, s: (0, 0))
    out_spec = pl.BlockSpec((1, Cout, T), lambda n, s: (n, 0, s))

    o1, o2 = pl.pallas_call(
        cross_1x1_kernel,
        out_shape=(jax.ShapeDtypeStruct((N, Cout, HWp), x.dtype),
                   jax.ShapeDtypeStruct((N, Cout, HWp), x.dtype)),
        grid=grid,
        in_specs=[in_spec, in_spec, w_spec, w_spec, w_spec, w_spec],
        out_specs=[out_spec, out_spec],
        compiler_params=pltpu.CompilerParams(
            dimension_semantics=("parallel", "parallel"),
            vmem_limit_bytes=vmem_limit),
    )(xf, yf, w1x, w1y, w2x, w2y)

    if HWp != HW:
        o1 = o1[:, :, :HW]
        o2 = o2[:, :, :HW]
    return o1.reshape(N, Cout, H, W), o2.reshape(N, Cout, H, W)


class BasicCrossBlockPallas:
    """Pallas equivalent of BasicCrossBlock (conv_cfg=None, norm_cfg=None)."""

    def __init__(self, in_channels, out_channels, key=None):
        if key is None:
            key = jax.random.PRNGKey(0)
        k1, k2 = jax.random.split(key)
        chn = in_channels * 2
        # normal_init(std=0.01), bias=False -> weight only, shape (Cout, 2*Cin)
        # (1x1 conv kernel dims squeezed).
        self.w1 = 0.01 * jax.random.normal(k1, (out_channels, chn), jnp.float32)
        self.w2 = 0.01 * jax.random.normal(k2, (out_channels, chn), jnp.float32)
        # Hoisted weight prep: split each weight into its x / y halves once
        # (fuses the channel concat; avoids per-call concat/split kernels).
        c = in_channels
        self.w1x, self.w1y = self.w1[:, :c], self.w1[:, c:]
        self.w2x, self.w2y = self.w2[:, :c], self.w2[:, c:]

    def __call__(self, x, y):
        return basic_cross_block(x, y, self.w1x, self.w1y, self.w2x, self.w2y)


def _reference(x, y, w1, w2):
    """Pure-JAX reference: channel concat + two 1x1 convs + ReLU (f32)."""
    xy = jnp.concatenate([x.astype(jnp.float32), y.astype(jnp.float32)], axis=1)
    out1 = jnp.maximum(jnp.einsum('nchw,oc->nohw', xy, w1), 0.0)
    out2 = jnp.maximum(jnp.einsum('nchw,oc->nohw', xy, w2), 0.0)
    return out1, out2


if __name__ == "__main__":
    key = jax.random.PRNGKey(0)
    k_x, k_y, k_w = jax.random.split(key, 3)

    N, Cin, Hs, Ws = 2, 4, 16, 16
    Cout = 8
    x = jax.random.normal(k_x, (N, Cin, Hs, Ws), dtype=jnp.float32)
    y = jax.random.normal(k_y, (N, Cin, Hs, Ws), dtype=jnp.float32)

    block = BasicCrossBlockPallas(Cin, Cout, key=k_w)
    ref1, ref2 = _reference(x, y, block.w1, block.w2)

    # f32 path
    out1, out2 = block(x, y)
    out1 = jax.block_until_ready(out1)
    out2 = jax.block_until_ready(out2)
    assert out1.shape == (N, Cout, Hs, Ws)
    assert out2.shape == (N, Cout, Hs, Ws)
    assert jnp.max(jnp.abs(out1 - ref1)) < 1e-5
    assert jnp.max(jnp.abs(out2 - ref2)) < 1e-5

    # bf16 I/O path (halves HBM traffic; accumulation stays f32 in-kernel).
    xb = x.astype(jnp.bfloat16)
    yb = y.astype(jnp.bfloat16)
    b1, b2 = block(xb, yb)
    b1 = jax.block_until_ready(b1)
    b2 = jax.block_until_ready(b2)
    assert b1.dtype == jnp.bfloat16 and b2.dtype == jnp.bfloat16
    assert jnp.max(jnp.abs(b1.astype(jnp.float32) - ref1)) < 1e-2
    assert jnp.max(jnp.abs(b2.astype(jnp.float32) - ref2)) < 1e-2

    print("KERNEL_OK")
</pallas_src>

<mosaic_0001>
module attributes {stable_mosaic.version = 11 : i64} {
  func.func @cross_1x1_kernel(%arg0: i32, %arg1: i32, %arg2: memref<1x4x256xf32, #tpu.memory_space<vmem>>, %arg3: memref<1x4x256xf32, #tpu.memory_space<vmem>>, %arg4: memref<8x4xf32, #tpu.memory_space<vmem>>, %arg5: memref<8x4xf32, #tpu.memory_space<vmem>>, %arg6: memref<8x4xf32, #tpu.memory_space<vmem>>, %arg7: memref<8x4xf32, #tpu.memory_space<vmem>>, %arg8: memref<1x8x256xf32, #tpu.memory_space<vmem>>, %arg9: memref<1x8x256xf32, #tpu.memory_space<vmem>>) attributes {dimension_semantics = [#tpu.dimension_semantics<parallel>, #tpu.dimension_semantics<parallel>], iteration_bounds = array<i64: 2, 1>, scalar_prefetch = 0 : i64, scratch_operands = 0 : i64, tpu.core_type = #tpu.core_type<tc>, window_params = [{transform_indices = @transform_0, window_bounds = array<i64: 1, 4, 256>}, {transform_indices = @transform_1, window_bounds = array<i64: 1, 4, 256>}, {pipeline_mode = #tpu.pipeline_mode<synchronous>, transform_indices = @transform_2, window_bounds = array<i64: 8, 4>}, {pipeline_mode = #tpu.pipeline_mode<synchronous>, transform_indices = @transform_3, window_bounds = array<i64: 8, 4>}, {pipeline_mode = #tpu.pipeline_mode<synchronous>, transform_indices = @transform_4, window_bounds = array<i64: 8, 4>}, {pipeline_mode = #tpu.pipeline_mode<synchronous>, transform_indices = @transform_5, window_bounds = array<i64: 8, 4>}, {transform_indices = @transform_6, window_bounds = array<i64: 1, 8, 256>}, {transform_indices = @transform_7, window_bounds = array<i64: 1, 8, 256>}]} {
    %c0 = arith.constant 0 : index
    %c0_0 = arith.constant 0 : index
    %c0_1 = arith.constant 0 : index
    %0 = vector.load %arg2[%c0, %c0_0, %c0_1] : memref<1x4x256xf32, #tpu.memory_space<vmem>>, vector<1x4x256xf32>
    %1 = vector.shape_cast %0 : vector<1x4x256xf32> to vector<4x256xf32>
    %c0_2 = arith.constant 0 : index
    %c0_3 = arith.constant 0 : index
    %c0_4 = arith.constant 0 : index
    %2 = vector.load %arg3[%c0_2, %c0_3, %c0_4] : memref<1x4x256xf32, #tpu.memory_space<vmem>>, vector<1x4x256xf32>
    %3 = vector.shape_cast %2 : vector<1x4x256xf32> to vector<4x256xf32>
    %c0_5 = arith.constant 0 : index
    %c0_6 = arith.constant 0 : index
    %4 = vector.load %arg4[%c0_5, %c0_6] : memref<8x4xf32, #tpu.memory_space<vmem>>, vector<8x4xf32>
    %cst = arith.constant dense<0.000000e+00> : vector<8x256xf32>
    %5 = tpu.matmul %4, %1, %cst {dimension_numbers = #tpu.dot_dimension_numbers<[1], [0], [0], [1], [0, 0, 1, 1], [], []>} : vector<8x4xf32>, vector<4x256xf32>, vector<8x256xf32> -> vector<8x256xf32>
    %c0_7 = arith.constant 0 : index
    %c0_8 = arith.constant 0 : index
    %6 = vector.load %arg5[%c0_7, %c0_8] : memref<8x4xf32, #tpu.memory_space<vmem>>, vector<8x4xf32>
    %cst_9 = arith.constant dense<0.000000e+00> : vector<8x256xf32>
    %7 = tpu.matmul %6, %3, %cst_9 {dimension_numbers = #tpu.dot_dimension_numbers<[1], [0], [0], [1], [0, 0, 1, 1], [], []>} : vector<8x4xf32>, vector<4x256xf32>, vector<8x256xf32> -> vector<8x256xf32>
    %8 = arith.addf %5, %7 : vector<8x256xf32>
    %cst_10 = arith.constant 0.000000e+00 : f32
    %9 = vector.broadcast %cst_10 : f32 to vector<8x256xf32>
    %10 = arith.maximumf %8, %9 : vector<8x256xf32>
    %c0_11 = arith.constant 0 : index
    %c0_12 = arith.constant 0 : index
    %c0_13 = arith.constant 0 : index
    %11 = vector.load %arg8[%c0_11, %c0_12, %c0_13] : memref<1x8x256xf32, #tpu.memory_space<vmem>>, vector<1x8x256xf32>
    %12 = vector.shape_cast %11 : vector<1x8x256xf32> to vector<8x256xf32>
    %13 = vector.shape_cast %10 : vector<8x256xf32> to vector<1x8x256xf32>
    tpu.vector_store %arg8[%c0_11, %c0_12, %c0_13], %13 {strides = array<i32>} : memref<1x8x256xf32, #tpu.memory_space<vmem>>, vector<1x8x256xf32>,
    %c0_14 = arith.constant 0 : index
    %c0_15 = arith.constant 0 : index
    %14 = vector.load %arg6[%c0_14, %c0_15] : memref<8x4xf32, #tpu.memory_space<vmem>>, vector<8x4xf32>
    %cst_16 = arith.constant dense<0.000000e+00> : vector<8x256xf32>
    %15 = tpu.matmul %14, %1, %cst_16 {dimension_numbers = #tpu.dot_dimension_numbers<[1], [0], [0], [1], [0, 0, 1, 1], [], []>} : vector<8x4xf32>, vector<4x256xf32>, vector<8x256xf32> -> vector<8x256xf32>
    %c0_17 = arith.constant 0 : index
    %c0_18 = arith.constant 0 : index
    %16 = vector.load %arg7[%c0_17, %c0_18] : memref<8x4xf32, #tpu.memory_space<vmem>>, vector<8x4xf32>
    %cst_19 = arith.constant dense<0.000000e+00> : vector<8x256xf32>
    %17 = tpu.matmul %16, %3, %cst_19 {dimension_numbers = #tpu.dot_dimension_numbers<[1], [0], [0], [1], [0, 0, 1, 1], [], []>} : vector<8x4xf32>, vector<4x256xf32>, vector<8x256xf32> -> vector<8x256xf32>
    %18 = arith.addf %15, %17 : vector<8x256xf32>
    %cst_20 = arith.constant 0.000000e+00 : f32
    %19 = vector.broadcast %cst_20 : f32 to vector<8x256xf32>
    %20 = arith.maximumf %18, %19 : vector<8x256xf32>
    %c0_21 = arith.constant 0 : index
    %c0_22 = arith.constant 0 : index
    %c0_23 = arith.constant 0 : index
    %21 = vector.load %arg9[%c0_21, %c0_22, %c0_23] : memref<1x8x256xf32, #tpu.memory_space<vmem>>, vector<1x8x256xf32>
    %22 = vector.shape_cast %21 : vector<1x8x256xf32> to vector<8x256xf32>
    %23 = vector.shape_cast %20 : vector<8x256xf32> to vector<1x8x256xf32>
    tpu.vector_store %arg9[%c0_21, %c0_22, %c0_23], %23 {strides = array<i32>} : memref<1x8x256xf32, #tpu.memory_space<vmem>>, vector<1x8x256xf32>,
    return
  }
  func.func @transform_0(%arg0: i32, %arg1: i32) -> (i32, i32, i32) {
    %c0_i32 = arith.constant 0 : i32
    %c0_i32_0 = arith.constant 0 : i32
    return %arg0, %c0_i32, %arg1 : i32, i32, i32
  }
  func.func @transform_1(%arg0: i32, %arg1: i32) -> (i32, i32, i32) {
    %c0_i32 = arith.constant 0 : i32
    %c0_i32_0 = arith.constant 0 : i32
    return %arg0, %c0_i32, %arg1 : i32, i32, i32
  }
  func.func @transform_2(%arg0: i32, %arg1: i32) -> (i32, i32) {
    %c0_i32 = arith.constant 0 : i32
    %c0_i32_0 = arith.constant 0 : i32
    %c0_i32_1 = arith.constant 0 : i32
    return %c0_i32, %c0_i32_0 : i32, i32
  }
  func.func @transform_3(%arg0: i32, %arg1: i32) -> (i32, i32) {
    %c0_i32 = arith.constant 0 : i32
    %c0_i32_0 = arith.constant 0 : i32
    %c0_i32_1 = arith.constant 0 : i32
    return %c0_i32, %c0_i32_0 : i32, i32
  }
  func.func @transform_4(%arg0: i32, %arg1: i32) -> (i32, i32) {
    %c0_i32 = arith.constant 0 : i32
    %c0_i32_0 = arith.constant 0 : i32
    %c0_i32_1 = arith.constant 0 : i32
    return %c0_i32, %c0_i32_0 : i32, i32
  }
  func.func @transform_5(%arg0: i32, %arg1: i32) -> (i32, i32) {
    %c0_i32 = arith.constant 0 : i32
    %c0_i32_0 = arith.constant 0 : i32
    %c0_i32_1 = arith.constant 0 : i32
    return %c0_i32, %c0_i32_0 : i32, i32
  }
  func.func @transform_6(%arg0: i32, %arg1: i32) -> (i32, i32, i32) {
    %c0_i32 = arith.constant 0 : i32
    %c0_i32_0 = arith.constant 0 : i32
    return %arg0, %c0_i32, %arg1 : i32, i32, i32
  }
  func.func @transform_7(%arg0: i32, %arg1: i32) -> (i32, i32, i32) {
    %c0_i32 = arith.constant 0 : i32
    %c0_i32_0 = arith.constant 0 : i32
    return %arg0, %c0_i32, %arg1 : i32, i32, i32
  }
}

</mosaic_0001>

<llo_original>
// kernel: tpu_custom_call.1
$region0: #{tpu_custom_call.1}
  #allocation0 [shape = 'u32[]', space=smem, size = 0x4, offset = 0x4, fixed_abs, tag = 'smem constant byte address 0x4 - core index']
  #allocation1 [shape = 'u32[144,128]{1,0:T(1,128)}', space=vmem, size = 0x12000, scoped, tag = 'internal scratch']
  %s0 = inlined_call_operand.vmem [shape: f32[2,4,256], index: 0, kind: input, shape index: {}]
  %s1 = inlined_call_operand.vmem [shape: f32[2,4,256], index: 1, kind: input, shape index: {}]
  %s2 = inlined_call_operand.vmem [shape: f32[8,4], index: 2, kind: input, shape index: {}]
  %s3 = inlined_call_operand.vmem [shape: f32[8,4], index: 3, kind: input, shape index: {}]
  %s4 = inlined_call_operand.vmem [shape: f32[8,4], index: 4, kind: input, shape index: {}]
  %s5 = inlined_call_operand.vmem [shape: f32[8,4], index: 5, kind: input, shape index: {}]
  %s6 = inlined_call_operand.hbm [shape: f32[2,8,256], index: 6, kind: output, shape index: {0}]
  %s7 = inlined_call_operand.hbm [shape: f32[2,8,256], index: 7, kind: output, shape index: {1}]
  %8 = xla_tuple %s6, %s7
  %s9 = sld [smem:[#allocation0]]
  $region65: #{tpu_custom_call.1} parent=0
    _
  %s11 = ssub.s32 1, %s9
  %s12 = scalar_select 0, %s11, %s9
  $region1: #{tpu_custom_call.1} parent=0
    #allocation2 [shape = 'u8[16384]{0}', space=vmem, size = 0x4000, scoped, tag = 'output window, operand 0']
    #allocation3 [shape = 's32[2]{0}', space=sflag, size = 0x8, scoped, tag = 'scoped memory for tpu_custom_call.1']
    #allocation4 [shape = 'u8[16384]{0}', space=vmem, size = 0x4000, scoped, tag = 'output window, operand 1']
    #allocation5 [shape = 's32[2]{0}', space=sflag, size = 0x8, scoped, tag = 'scoped memory for tpu_custom_call.1']
    %13 = vsyncpa [#allocation3], 0
    %s14 = scalar_lea.sflag [#allocation3], 1
    %15 = vsyncpa %s14, 0
    %16 = vsyncpa [#allocation5], 0
    %s17 = scalar_lea.sflag [#allocation5], 1
    %18 = vsyncpa %s17, 0
    loop: start=0, step=1, limit=4
    $region2: #{tpu_custom_call.1} parent=1 // loop_pre_header
      _
    $region3: #{tpu_custom_call.1} parent=1 // loop_header
      %s20 = sphi 0, %s24
      %p21 = scmp.ge.s32.totalorder %s20, 4
      %s27 = sphi 0, %s39
      %s28 = sphi 0, %s35
      %s29 = sphi 0, %s27
      %s30 = sphi 0, %s28
      %s31 = sphi 0, %s29
      %s32 = sphi 0, %s30
      %s44 = sphi 0, %s46
      %s47 = sphi 0, %s44
      %s48 = sphi 0, %s47
      %s64 = sphi 0, %s48
      %s72 = sphi 0, %s74
      %s75 = sphi 0, %s72
      %s76 = sphi 0, %s75
      %s92 = sphi 0, %s76
      %s96 = sphi 0, %s96
      %s98 = sphi 0, %s96
      %s99 = sphi 0, %s98
      %s113 = sphi 0, %s99
      %s117 = sphi 0, %s117
      %s119 = sphi 0, %s117
      %s120 = sphi 0, %s119
      %s134 = sphi 0, %s120
      %s138 = sphi 0, %s138
      %s140 = sphi 0, %s138
      %s141 = sphi 0, %s140
      %s155 = sphi 0, %s141
      %s159 = sphi 0, %s159
      %s161 = sphi 0, %s159
      %s162 = sphi 0, %s161
      %s176 = sphi 0, %s162
      %s184 = sphi 0, %s186
      %s187 = sphi 0, %s184
      %s188 = sphi 0, %s187
      %s204 = sphi 0, %s188
      %s212 = sphi 0, %s214
      %s215 = sphi 0, %s212
      %s216 = sphi 0, %s215
      %s232 = sphi 0, %s216
    $region4: #{tpu_custom_call.1} parent=1 // loop_header_branch
      %23 = sbr.rel (%p21) target = $region8
    $region5: #{tpu_custom_call.1} parent=1 // loop_body
      %s25 = ssub.s32 %s20, 1
      %s26 = ssub.s32 %s20, 2
      %s33 = sadd.s32 1, %s28
      %p34 = scmp.ge.s32.totalorder %s33, 1
      %s35 = scalar_select %p34, 0, %s33
      %s36 = sadd.s32 1, %s27
      %s37 = scalar_select %p34, %s36, %s27
      %p38 = scmp.ge.s32.totalorder %s37, 2
      %s39 = scalar_select %p38, 0, %s37
      %s40 = ssub.s32 %s27, %s39
      %s41 = ssub.s32 %s28, %s35
      %s42 = sor.u32 %s40, %s41
      %p43 = scmp.eq.s32.totalorder %s42, 0
      %s45 = sadd.s32 %s44, 1
      %s46 = scalar_select %p43, %s44, %s45
      %p49 = pneg %p43
      %p50 = scmp.eq.s32.totalorder %s20, 1
      %p51 = por %p49, %p50
      %p52 = scmp.ne.s32.totalorder %s44, %s47
      %p53 = scmp.eq.s32.totalorder %s20, 0
      %p54 = por %p52, %p53
      %p55 = scmp.ne.s32.totalorder %s44, %s47
      %p56 = scmp.eq.s32.totalorder %s25, 1
      %p57 = por %p55, %p56
      %p58 = scmp.ne.s32.totalorder %s47, %s48
      %p59 = scmp.eq.s32.totalorder %s25, 0
      %p60 = por %p58, %p59
      %p61 = scmp.ne.s32.totalorder %s47, %s48
      %p62 = scmp.eq.s32.totalorder %s26, 1
      %p63 = por %p61, %p62
      %p65 = scmp.ne.s32.totalorder %s48, %s64
      %p66 = scmp.eq.s32.totalorder %s26, 0
      %p67 = por %p65, %p66
      %s68 = ssub.s32 %s27, %s39
      %s69 = ssub.s32 %s28, %s35
      %s70 = sor.u32 %s68, %s69
      %p71 = scmp.eq.s32.totalorder %s70, 0
      %s73 = sadd.s32 %s72, 1
      %s74 = scalar_select %p71, %s72, %s73
      %p77 = pneg %p71
      %p78 = scmp.eq.s32.totalorder %s20, 1
      %p79 = por %p77, %p78
      %p80 = scmp.ne.s32.totalorder %s72, %s75
      %p81 = scmp.eq.s32.totalorder %s20, 0
      %p82 = por %p80, %p81
      %p83 = scmp.ne.s32.totalorder %s72, %s75
      %p84 = scmp.eq.s32.totalorder %s25, 1
      %p85 = por %p83, %p84
      %p86 = scmp.ne.s32.totalorder %s75, %s76
      %p87 = scmp.eq.s32.totalorder %s25, 0
      %p88 = por %p86, %p87
      %p89 = scmp.ne.s32.totalorder %s75, %s76
      %p90 = scmp.eq.s32.totalorder %s26, 1
      %p91 = por %p89, %p90
      %p93 = scmp.ne.s32.totalorder %s76, %s92
      %p94 = scmp.eq.s32.totalorder %s26, 0
      %p95 = por %p93, %p94
      %s97 = sadd.s32 %s96, 1
      %p100 = scmp.eq.s32.totalorder %s20, 1
      %p101 = scmp.ne.s32.totalorder %s96, %s98
      %p102 = scmp.eq.s32.totalorder %s20, 0
      %p103 = por %p101, %p102
      %p104 = scmp.ne.s32.totalorder %s96, %s98
      %p105 = scmp.eq.s32.totalorder %s25, 1
      %p106 = por %p104, %p105
      %p107 = scmp.ne.s32.totalorder %s98, %s99
      %p108 = scmp.eq.s32.totalorder %s25, 0
      %p109 = por %p107, %p108
      %p110 = scmp.ne.s32.totalorder %s98, %s99
      %p111 = scmp.eq.s32.totalorder %s26, 1
      %p112 = por %p110, %p111
      %p114 = scmp.ne.s32.totalorder %s99, %s113
      %p115 = scmp.eq.s32.totalorder %s26, 0
      %p116 = por %p114, %p115
      %s118 = sadd.s32 %s117, 1
      %p121 = scmp.eq.s32.totalorder %s20, 1
      %p122 = scmp.ne.s32.totalorder %s117, %s119
      %p123 = scmp.eq.s32.totalorder %s20, 0
      %p124 = por %p122, %p123
      %p125 = scmp.ne.s32.totalorder %s117, %s119
      %p126 = scmp.eq.s32.totalorder %s25, 1
      %p127 = por %p125, %p126
      %p128 = scmp.ne.s32.totalorder %s119, %s120
      %p129 = scmp.eq.s32.totalorder %s25, 0
      %p130 = por %p128, %p129
      %p131 = scmp.ne.s32.totalorder %s119, %s120
      %p132 = scmp.eq.s32.totalorder %s26, 1
      %p133 = por %p131, %p132
      %p135 = scmp.ne.s32.totalorder %s120, %s134
      %p136 = scmp.eq.s32.totalorder %s26, 0
      %p137 = por %p135, %p136
      %s139 = sadd.s32 %s138, 1
      %p142 = scmp.eq.s32.totalorder %s20, 1
      %p143 = scmp.ne.s32.totalorder %s138, %s140
      %p144 = scmp.eq.s32.totalorder %s20, 0
      %p145 = por %p143, %p144
      %p146 = scmp.ne.s32.totalorder %s138, %s140
      %p147 = scmp.eq.s32.totalorder %s25, 1
      %p148 = por %p146, %p147
      %p149 = scmp.ne.s32.totalorder %s140, %s141
      %p150 = scmp.eq.s32.totalorder %s25, 0
      %p151 = por %p149, %p150
      %p152 = scmp.ne.s32.totalorder %s140, %s141
      %p153 = scmp.eq.s32.totalorder %s26, 1
      %p154 = por %p152, %p153
      %p156 = scmp.ne.s32.totalorder %s141, %s155
      %p157 = scmp.eq.s32.totalorder %s26, 0
      %p158 = por %p156, %p157
      %s160 = sadd.s32 %s159, 1
      %p163 = scmp.eq.s32.totalorder %s20, 1
      %p164 = scmp.ne.s32.totalorder %s159, %s161
      %p165 = scmp.eq.s32.totalorder %s20, 0
      %p166 = por %p164, %p165
      %p167 = scmp.ne.s32.totalorder %s159, %s161
      %p168 = scmp.eq.s32.totalorder %s25, 1
      %p169 = por %p167, %p168
      %p170 = scmp.ne.s32.totalorder %s161, %s162
      %p171 = scmp.eq.s32.totalorder %s25, 0
      %p172 = por %p170, %p171
      %p173 = scmp.ne.s32.totalorder %s161, %s162
      %p174 = scmp.eq.s32.totalorder %s26, 1
      %p175 = por %p173, %p174
      %p177 = scmp.ne.s32.totalorder %s162, %s176
      %p178 = scmp.eq.s32.totalorder %s26, 0
      %p179 = por %p177, %p178
      %s180 = ssub.s32 %s27, %s39
      %s181 = ssub.s32 %s28, %s35
      %s182 = sor.u32 %s180, %s181
      %p183 = scmp.eq.s32.totalorder %s182, 0
      %s185 = sadd.s32 %s184, 1
      %s186 = scalar_select %p183, %s184, %s185
      %p189 = pneg %p183
      %p190 = scmp.eq.s32.totalorder %s20, 1
      %p191 = por %p189, %p190
      %p192 = scmp.ne.s32.totalorder %s184, %s187
      %p193 = scmp.eq.s32.totalorder %s20, 0
      %p194 = por %p192, %p193
      %p195 = scmp.ne.s32.totalorder %s184, %s187
      %p196 = scmp.eq.s32.totalorder %s25, 1
      %p197 = por %p195, %p196
      %p198 = scmp.ne.s32.totalorder %s187, %s188
      %p199 = scmp.eq.s32.totalorder %s25, 0
      %p200 = por %p198, %p199
      %p201 = scmp.ne.s32.totalorder %s187, %s188
      %p202 = scmp.eq.s32.totalorder %s26, 1
      %p203 = por %p201, %p202
      %p205 = scmp.ne.s32.totalorder %s188, %s204
      %p206 = scmp.eq.s32.totalorder %s26, 0
      %p207 = por %p205, %p206
      %s208 = ssub.s32 %s27, %s39
      %s209 = ssub.s32 %s28, %s35
      %s210 = sor.u32 %s208, %s209
      %p211 = scmp.eq.s32.totalorder %s210, 0
      %s213 = sadd.s32 %s212, 1
      %s214 = scalar_select %p211, %s212, %s213
      %p217 = pneg %p211
      %p218 = scmp.eq.s32.totalorder %s20, 1
      %p219 = por %p217, %p218
      %p220 = scmp.ne.s32.totalorder %s212, %s215
      %p221 = scmp.eq.s32.totalorder %s20, 0
      %p222 = por %p220, %p221
      %p223 = scmp.ne.s32.totalorder %s212, %s215
      %p224 = scmp.eq.s32.totalorder %s25, 1
      %p225 = por %p223, %p224
      %p226 = scmp.ne.s32.totalorder %s215, %s216
      %p227 = scmp.eq.s32.totalorder %s25, 0
      %p228 = por %p226, %p227
      %p229 = scmp.ne.s32.totalorder %s215, %s216
      %p230 = scmp.eq.s32.totalorder %s26, 1
      %p231 = por %p229, %p230
      %p233 = scmp.ne.s32.totalorder %s216, %s232
      %p234 = scmp.eq.s32.totalorder %s26, 0
      %p235 = por %p233, %p234
      %p236 = scmp.le.s32.totalorder 1, %s20
      %p237 = scmp.lt.s32.totalorder %s20, 3
      %p238 = pnand %p236, %p237
      %p239 = pneg %p238
      // Predicated region
      $region9: #{tpu_custom_call.1} parent=5 // pred_check
        _
      $region10: #{tpu_custom_call.1} parent=5 // pred_check_branch
        %241 = sbr.rel (%p238) target = $region12
      $region11: #{tpu_custom_call.1} parent=5 // pred_region
        %s242 = ssub.s32 %s20, 1
        // Predicated region
        $region13: #{tpu_custom_call.1} parent=11 // pred_check
          %p243 = pneg %p109
        $region14: #{tpu_custom_call.1} parent=11 // pred_check_branch
          %245 = sbr.rel (%p243) target = $region16
        $region15: #{tpu_custom_call.1} parent=11 // pred_region
          _
        $region16: #{tpu_custom_call.1} parent=11 // pred_fallthru
          _
        // Predicated region
        $region17: #{tpu_custom_call.1} parent=11 // pred_check
          %p246 = pneg %p130
        $region18: #{tpu_custom_call.1} parent=11 // pred_check_branch
          %248 = sbr.rel (%p246) target = $region20
        $region19: #{tpu_custom_call.1} parent=11 // pred_region
          _
        $region20: #{tpu_custom_call.1} parent=11 // pred_fallthru
          _
        // Predicated region
        $region21: #{tpu_custom_call.1} parent=11 // pred_check
          %p249 = pneg %p151
        $region22: #{tpu_custom_call.1} parent=11 // pred_check_branch
          %251 = sbr.rel (%p249) target = $region24
        $region23: #{tpu_custom_call.1} parent=11 // pred_region
          _
        $region24: #{tpu_custom_call.1} parent=11 // pred_fallthru
          _
        // Predicated region
        $region25: #{tpu_custom_call.1} parent=11 // pred_check
          %p252 = pneg %p172
        $region26: #{tpu_custom_call.1} parent=11 // pred_check_branch
          %254 = sbr.rel (%p252) target = $region28
        $region27: #{tpu_custom_call.1} parent=11 // pred_region
          _
        $region28: #{tpu_custom_call.1} parent=11 // pred_fallthru
          _
      $region12: #{tpu_custom_call.1} parent=5 // pred_fallthru
        _
      %p255 = scmp.lt.s32.totalorder %s20, 2
      // Predicated region
      $region29: #{tpu_custom_call.1} parent=5 // pred_check
        %p256 = pneg %p255
      $region30: #{tpu_custom_call.1} parent=5 // pred_check_branch
        %258 = sbr.rel (%p256) target = $region32
      $region31: #{tpu_custom_call.1} parent=5 // pred_region
        // Predicated region
        $region33: #{tpu_custom_call.1} parent=31 // pred_check
          %p259 = pneg %p54
        $region34: #{tpu_custom_call.1} parent=31 // pred_check_branch
          %261 = sbr.rel (%p259) target = $region36
        $region35: #{tpu_custom_call.1} parent=31 // pred_region
          %s262 = smul.u32 2, %s28
          %p263 = scmp.lt.s32.totalorder %s27, 1
          %s264 = scalar_select %p263, %s27, 1
          %p265 = scmp.lt.s32.totalorder %s262, 1
          %s266 = scalar_select %p265, %s262, 1
          %s267 = smul.addr %s264, 2
          %s268 = sadd.s32 %s266, %s267
          %s269 = smul.addr %s268, 4
          %s270 = scalar_lea.vmem %s0, %s269
          %s271 = smul.u32 2, %s28
        $region36: #{tpu_custom_call.1} parent=31 // pred_fallthru
          _
        // Predicated region
        $region37: #{tpu_custom_call.1} parent=31 // pred_check
          %p272 = pneg %p82
        $region38: #{tpu_custom_call.1} parent=31 // pred_check_branch
          %274 = sbr.rel (%p272) target = $region40
        $region39: #{tpu_custom_call.1} parent=31 // pred_region
          %s275 = smul.u32 2, %s28
          %p276 = scmp.lt.s32.totalorder %s27, 1
          %s277 = scalar_select %p276, %s27, 1
          %p278 = scmp.lt.s32.totalorder %s275, 1
          %s279 = scalar_select %p278, %s275, 1
          %s280 = smul.addr %s277, 2
          %s281 = sadd.s32 %s279, %s280
          %s282 = smul.addr %s281, 4
          %s283 = scalar_lea.vmem %s1, %s282
          %s284 = smul.u32 2, %s28
        $region40: #{tpu_custom_call.1} parent=31 // pred_fallthru
          _
      $region32: #{tpu_custom_call.1} parent=5 // pred_fallthru
        _
      %p285 = scmp.le.s32.totalorder 1, %s20
      %p286 = scmp.lt.s32.totalorder %s20, 3
      %p287 = pnand %p285, %p286
      %p288 = pneg %p287
      // Predicated region
      $region41: #{tpu_custom_call.1} parent=5 // pred_check
        _
      $region42: #{tpu_custom_call.1} parent=5 // pred_check_branch
        %290 = sbr.rel (%p287) target = $region44
      $region43: #{tpu_custom_call.1} parent=5 // pred_region
        %s291 = ssub.s32 %s20, 1
        %s292 = smul.u32 2, %s30
        %p293 = scmp.lt.s32.totalorder %s29, 1
        %s294 = scalar_select %p293, %s29, 1
        %p295 = scmp.lt.s32.totalorder %s292, 1
        %s296 = scalar_select %p295, %s292, 1
        %s297 = smul.addr %s294, 2
        %s298 = sadd.s32 %s296, %s297
        %s299 = smul.addr %s298, 4
        %s300 = scalar_lea.vmem %s0, %s299
        %p301 = pneg %p60
        %p302 = pneg %p57
        %s303 = smul.u32 2, %s30
        %p304 = scmp.lt.s32.totalorder %s29, 1
        %s305 = scalar_select %p304, %s29, 1
        %p306 = scmp.lt.s32.totalorder %s303, 1
        %s307 = scalar_select %p306, %s303, 1
        %s308 = smul.addr %s305, 2
        %s309 = sadd.s32 %s307, %s308
        %s310 = smul.addr %s309, 4
        %s311 = scalar_lea.vmem %s1, %s310
        %p312 = pneg %p88
        %p313 = pneg %p85
        %p314 = pneg %p109
        %p315 = pneg %p106
        %p316 = pneg %p130
        %p317 = pneg %p127
        %p318 = pneg %p151
        %p319 = pneg %p148
        %p320 = pneg %p172
        %p321 = pneg %p169
        %p322 = pneg %p200
        %p323 = pneg %p197
        %s324 = sand.u32 %s187, 1
        %s325 = scalar_lea.sflag [#allocation3], %s324
        %s326 = sand.u32 %s187, 1
        %s327 = smul.addr %s326, 16
        %s328 = scalar_lea.vmem [#allocation2], %s327
        %p329 = pneg %p228
        %p330 = pneg %p225
        %s331 = sand.u32 %s215, 1
        %s332 = scalar_lea.sflag [#allocation5], %s331
        %s333 = sand.u32 %s215, 1
        %s334 = smul.addr %s333, 16
        %s335 = scalar_lea.vmem [#allocation4], %s334
        %s336 = smul.u32 2, %s30
        %p337 = scmp.lt.s32.totalorder %s29, 1
        %s338 = scalar_select %p337, %s29, 1
        %p339 = scmp.lt.s32.totalorder %s336, 1
        %s340 = scalar_select %p339, %s336, 1
        %s341 = smul.addr %s338, 2
        %s342 = sadd.s32 %s340, %s341
        %s343 = smul.addr %s342, 4
        %s344 = scalar_lea.vmem %s0, %s343
        %s345 = smul.u32 2, %s30
        %s346 = smul.u32 2, %s30
        %p347 = scmp.lt.s32.totalorder %s29, 1
        %s348 = scalar_select %p347, %s29, 1
        %p349 = scmp.lt.s32.totalorder %s346, 1
        %s350 = scalar_select %p349, %s346, 1
        %s351 = smul.addr %s348, 2
        %s352 = sadd.s32 %s350, %s351
        %s353 = smul.addr %s352, 4
        %s354 = scalar_lea.vmem %s1, %s353
        %s355 = smul.u32 2, %s30
        %s356 = smul.u32 2, %s30
        %s357 = smul.u32 2, %s30
        %v358 = vld [vmem:[%s344] sm:$0xff]
        %v359 = vld [vmem:[%s354] sm:$0xff]
        %v360 = vld [vmem:[%s2] sm:$0xff]
        %v361 = vld [vmem:[%s3] sm:$0xff]
        %v363 = vcombine.high %v359, %v359
        %vm364 = vcmask 31744
        %v366 = vsel %vm364, %v361, 0
        %vm368 = vcmask 1043456
        %v369 = vsel %vm368, %v359, 0
        %v371 = vsel %vm368, %v363, 0
        %373 = vmatprep.subr.mxu0 0.0
        %374 = vmatpush1.msra.mxu0 0.0
        %375 = vmatprep.subr.mxu0 0.0
        %376 = vmatpush1.msra.mxu0 0.0
        %377 = vmatprep.subr.mxu0 0.0
        %378 = vmatpush1.msra.mxu0 0.0
        %379 = vmatprep.subr.mxu0 0.0
        %380 = vmatpush1.msra.mxu0 0.0
        %381 = vmatprep.subr.mxu0 0.0
        %382 = vmatpush1.msra.mxu0 0.0
        %383 = vmatprep.subr.mxu0 0.0
        %384 = vmatpush1.msra.mxu0 0.0
        %385 = vmatprep.subr.mxu0 0.0
        %386 = vmatpush1.msra.mxu0 0.0
        %387 = vmatprep.subr.mxu0 0.0
        %388 = vmatpush1.msra.mxu0 0.0
        %389 = vmatprep.subr.mxu0 0.0
        %390 = vmatpush1.msra.mxu0 0.0
        %391 = vmatprep.subr.mxu0 0.0
        %392 = vmatpush1.msra.mxu0 0.0
        %393 = vmatprep.subr.mxu0 0.0
        %394 = vmatpush1.msra.mxu0 0.0
        %395 = vmatprep.subr.mxu0 0.0
        %396 = vmatpush1.msra.mxu0 0.0
        %397 = vmatprep.subr.mxu0 0.0
        %398 = vmatpush1.msra.mxu0 0.0
        %399 = vmatprep.subr.mxu0 0.0
        %400 = vmatpush1.msra.mxu0 0.0
        %401 = vmatprep.subr.mxu0 0.0
        %402 = vmatpush1.msra.mxu0 0.0
        %403 = vmatprep.subr.mxu0 %v371
        %404 = vmatpush1.msra.mxu0 %v369
        %405 = vmatprep.subr.mxu0 0.0
        %406 = vmatpush2.msra.mxu0 0.0
        %407 = vmatprep.subr.mxu0 0.0
        %408 = vmatpush2.msra.mxu0 0.0
        %409 = vmatprep.subr.mxu0 0.0
        %410 = vmatpush2.msra.mxu0 0.0
        %411 = vmatprep.subr.mxu0 0.0
        %412 = vmatpush2.msra.mxu0 0.0
        %413 = vmatprep.subr.mxu0 0.0
        %414 = vmatpush2.msra.mxu0 0.0
        %415 = vmatprep.subr.mxu0 0.0
        %416 = vmatpush2.msra.mxu0 0.0
        %417 = vmatprep.subr.mxu0 0.0
        %418 = vmatpush2.msra.mxu0 0.0
        %419 = vmatprep.subr.mxu0 0.0
        %420 = vmatpush2.msra.mxu0 0.0
        %421 = vmatprep.subr.mxu0 0.0
        %422 = vmatpush2.msra.mxu0 0.0
        %423 = vmatprep.subr.mxu0 0.0
        %424 = vmatpush2.msra.mxu0 0.0
        %425 = vmatprep.subr.mxu0 0.0
        %426 = vmatpush2.msra.mxu0 0.0
        %427 = vmatprep.subr.mxu0 0.0
        %428 = vmatpush2.msra.mxu0 0.0
        %429 = vmatprep.subr.mxu0 0.0
        %430 = vmatpush2.msra.mxu0 0.0
        %431 = vmatprep.subr.mxu0 0.0
        %432 = vmatpush2.msra.mxu0 0.0
        %433 = vmatprep.subr.mxu0 0.0
        %434 = vmatpush2.msra.mxu0 0.0
        %435 = vmatprep.subr.mxu0 0.0
        %436 = vmatpush2.msra.mxu0 0.0
        %437 = vmatprep.mubr.f32.mxu0 0.0
        %438 = vmatmul.mubr.f32.gmra.mxu0 %v366
        %v439 = vpop.f32.mrf.mxu0
        %v440 = vadd.f32 0.0, %v439
        %v441 = vpop.f32.mrf.mxu0
        %v442 = vadd.f32 0.0, %v441
        %443 = vdwg.mxu0
        %v445 = vcombine.high %v358, %v358
        %v447 = vsel %vm364, %v360, 0
        %v449 = vsel %vm368, %v358, 0
        %v451 = vsel %vm368, %v445, 0
        %453 = vmatprep.subr.mxu0 0.0
        %454 = vmatpush1.msra.mxu0 0.0
        %455 = vmatprep.subr.mxu0 0.0
        %456 = vmatpush1.msra.mxu0 0.0
        %457 = vmatprep.subr.mxu0 0.0
        %458 = vmatpush1.msra.mxu0 0.0
        %459 = vmatprep.subr.mxu0 0.0
        %460 = vmatpush1.msra.mxu0 0.0
        %461 = vmatprep.subr.mxu0 0.0
        %462 = vmatpush1.msra.mxu0 0.0
        %463 = vmatprep.subr.mxu0 0.0
        %464 = vmatpush1.msra.mxu0 0.0
        %465 = vmatprep.subr.mxu0 0.0
        %466 = vmatpush1.msra.mxu0 0.0
        %467 = vmatprep.subr.mxu0 0.0
        %468 = vmatpush1.msra.mxu0 0.0
        %469 = vmatprep.subr.mxu0 0.0
        %470 = vmatpush1.msra.mxu0 0.0
        %471 = vmatprep.subr.mxu0 0.0
        %472 = vmatpush1.msra.mxu0 0.0
        %473 = vmatprep.subr.mxu0 0.0
        %474 = vmatpush1.msra.mxu0 0.0
        %475 = vmatprep.subr.mxu0 0.0
        %476 = vmatpush1.msra.mxu0 0.0
        %477 = vmatprep.subr.mxu0 0.0
        %478 = vmatpush1.msra.mxu0 0.0
        %479 = vmatprep.subr.mxu0 0.0
        %480 = vmatpush1.msra.mxu0 0.0
        %481 = vmatprep.subr.mxu0 0.0
        %482 = vmatpush1.msra.mxu0 0.0
        %483 = vmatprep.subr.mxu0 %v451
        %484 = vmatpush1.msra.mxu0 %v449
        %485 = vmatprep.subr.mxu0 0.0
        %486 = vmatpush2.msra.mxu0 0.0
        %487 = vmatprep.subr.mxu0 0.0
        %488 = vmatpush2.msra.mxu0 0.0
        %489 = vmatprep.subr.mxu0 0.0
        %490 = vmatpush2.msra.mxu0 0.0
        %491 = vmatprep.subr.mxu0 0.0
        %492 = vmatpush2.msra.mxu0 0.0
        %493 = vmatprep.subr.mxu0 0.0
        %494 = vmatpush2.msra.mxu0 0.0
        %495 = vmatprep.subr.mxu0 0.0
        %496 = vmatpush2.msra.mxu0 0.0
        %497 = vmatprep.subr.mxu0 0.0
        %498 = vmatpush2.msra.mxu0 0.0
        %499 = vmatprep.subr.mxu0 0.0
        %500 = vmatpush2.msra.mxu0 0.0
        %501 = vmatprep.subr.mxu0 0.0
        %502 = vmatpush2.msra.mxu0 0.0
        %503 = vmatprep.subr.mxu0 0.0
        %504 = vmatpush2.msra.mxu0 0.0
        %505 = vmatprep.subr.mxu0 0.0
        %506 = vmatpush2.msra.mxu0 0.0
        %507 = vmatprep.subr.mxu0 0.0
        %508 = vmatpush2.msra.mxu0 0.0
        %509 = vmatprep.subr.mxu0 0.0
        %510 = vmatpush2.msra.mxu0 0.0
        %511 = vmatprep.subr.mxu0 0.0
        %512 = vmatpush2.msra.mxu0 0.0
        %513 = vmatprep.subr.mxu0 0.0
        %514 = vmatpush2.msra.mxu0 0.0
        %515 = vmatprep.subr.mxu0 0.0
        %516 = vmatpush2.msra.mxu0 0.0
        %517 = vmatprep.mubr.f32.mxu0 0.0
        %518 = vmatmul.mubr.f32.gmra.mxu0 %v447
        %v519 = vpop.f32.mrf.mxu0
        %v520 = vadd.f32 %v440, %v519
        %v521 = vpop.f32.mrf.mxu0
        %v522 = vadd.f32 %v442, %v521
        %523 = vdwg.mxu0
        %v524 = vmax.f32 %v520, 0.0
        %v525 = vmax.f32 %v522, 0.0
        %526 = vst [vmem:[%s328] sm:$0xff] %v524
        %527 = vst [vmem:[%s328 + $0x8] sm:$0xff] %v525
        %v528 = vld [vmem:[%s4] sm:$0xff]
        %v529 = vld [vmem:[%s5] sm:$0xff]
        %v531 = vsel %vm364, %v529, 0
        %533 = vmatprep.subr.mxu0 0.0
        %534 = vmatpush1.msra.mxu0 0.0
        %535 = vmatprep.subr.mxu0 0.0
        %536 = vmatpush1.msra.mxu0 0.0
        %537 = vmatprep.subr.mxu0 0.0
        %538 = vmatpush1.msra.mxu0 0.0
        %539 = vmatprep.subr.mxu0 0.0
        %540 = vmatpush1.msra.mxu0 0.0
        %541 = vmatprep.subr.mxu0 0.0
        %542 = vmatpush1.msra.mxu0 0.0
        %543 = vmatprep.subr.mxu0 0.0
        %544 = vmatpush1.msra.mxu0 0.0
        %545 = vmatprep.subr.mxu0 0.0
        %546 = vmatpush1.msra.mxu0 0.0
        %547 = vmatprep.subr.mxu0 0.0
        %548 = vmatpush1.msra.mxu0 0.0
        %549 = vmatprep.subr.mxu0 0.0
        %550 = vmatpush1.msra.mxu0 0.0
        %551 = vmatprep.subr.mxu0 0.0
        %552 = vmatpush1.msra.mxu0 0.0
        %553 = vmatprep.subr.mxu0 0.0
        %554 = vmatpush1.msra.mxu0 0.0
        %555 = vmatprep.subr.mxu0 0.0
        %556 = vmatpush1.msra.mxu0 0.0
        %557 = vmatprep.subr.mxu0 0.0
        %558 = vmatpush1.msra.mxu0 0.0
        %559 = vmatprep.subr.mxu0 0.0
        %560 = vmatpush1.msra.mxu0 0.0
        %561 = vmatprep.subr.mxu0 0.0
        %562 = vmatpush1.msra.mxu0 0.0
        %563 = vmatprep.subr.mxu0 %v371
        %564 = vmatpush1.msra.mxu0 %v369
        %565 = vmatprep.subr.mxu0 0.0
        %566 = vmatpush2.msra.mxu0 0.0
        %567 = vmatprep.subr.mxu0 0.0
        %568 = vmatpush2.msra.mxu0 0.0
        %569 = vmatprep.subr.mxu0 0.0
        %570 = vmatpush2.msra.mxu0 0.0
        %571 = vmatprep.subr.mxu0 0.0
        %572 = vmatpush2.msra.mxu0 0.0
        %573 = vmatprep.subr.mxu0 0.0
        %574 = vmatpush2.msra.mxu0 0.0
        %575 = vmatprep.subr.mxu0 0.0
        %576 = vmatpush2.msra.mxu0 0.0
        %577 = vmatprep.subr.mxu0 0.0
        %578 = vmatpush2.msra.mxu0 0.0
        %579 = vmatprep.subr.mxu0 0.0
        %580 = vmatpush2.msra.mxu0 0.0
        %581 = vmatprep.subr.mxu0 0.0
        %582 = vmatpush2.msra.mxu0 0.0
        %583 = vmatprep.subr.mxu0 0.0
        %584 = vmatpush2.msra.mxu0 0.0
        %585 = vmatprep.subr.mxu0 0.0
        %586 = vmatpush2.msra.mxu0 0.0
        %587 = vmatprep.subr.mxu0 0.0
        %588 = vmatpush2.msra.mxu0 0.0
        %589 = vmatprep.subr.mxu0 0.0
        %590 = vmatpush2.msra.mxu0 0.0
        %591 = vmatprep.subr.mxu0 0.0
        %592 = vmatpush2.msra.mxu0 0.0
        %593 = vmatprep.subr.mxu0 0.0
        %594 = vmatpush2.msra.mxu0 0.0
        %595 = vmatprep.subr.mxu0 0.0
        %596 = vmatpush2.msra.mxu0 0.0
        %597 = vmatprep.mubr.f32.mxu0 0.0
        %598 = vmatmul.mubr.f32.gmra.mxu0 %v531
        %v599 = vpop.f32.mrf.mxu0
        %v600 = vadd.f32 0.0, %v599
        %v601 = vpop.f32.mrf.mxu0
        %v602 = vadd.f32 0.0, %v601
        %603 = vdwg.mxu0
        %v605 = vsel %vm364, %v528, 0
        %607 = vmatprep.subr.mxu0 0.0
        %608 = vmatpush1.msra.mxu0 0.0
        %609 = vmatprep.subr.mxu0 0.0
        %610 = vmatpush1.msra.mxu0 0.0
        %611 = vmatprep.subr.mxu0 0.0
        %612 = vmatpush1.msra.mxu0 0.0
        %613 = vmatprep.subr.mxu0 0.0
        %614 = vmatpush1.msra.mxu0 0.0
        %615 = vmatprep.subr.mxu0 0.0
        %616 = vmatpush1.msra.mxu0 0.0
        %617 = vmatprep.subr.mxu0 0.0
        %618 = vmatpush1.msra.mxu0 0.0
        %619 = vmatprep.subr.mxu0 0.0
        %620 = vmatpush1.msra.mxu0 0.0
        %621 = vmatprep.subr.mxu0 0.0
        %622 = vmatpush1.msra.mxu0 0.0
        %623 = vmatprep.subr.mxu0 0.0
        %624 = vmatpush1.msra.mxu0 0.0
        %625 = vmatprep.subr.mxu0 0.0
        %626 = vmatpush1.msra.mxu0 0.0
        %627 = vmatprep.subr.mxu0 0.0
        %628 = vmatpush1.msra.mxu0 0.0
        %629 = vmatprep.subr.mxu0 0.0
        %630 = vmatpush1.msra.mxu0 0.0
        %631 = vmatprep.subr.mxu0 0.0
        %632 = vmatpush1.msra.mxu0 0.0
        %633 = vmatprep.subr.mxu0 0.0
        %634 = vmatpush1.msra.mxu0 0.0
        %635 = vmatprep.subr.mxu0 0.0
        %636 = vmatpush1.msra.mxu0 0.0
        %637 = vmatprep.subr.mxu0 %v451
        %638 = vmatpush1.msra.mxu0 %v449
        %639 = vmatprep.subr.mxu0 0.0
        %640 = vmatpush2.msra.mxu0 0.0
        %641 = vmatprep.subr.mxu0 0.0
        %642 = vmatpush2.msra.mxu0 0.0
        %643 = vmatprep.subr.mxu0 0.0
        %644 = vmatpush2.msra.mxu0 0.0
        %645 = vmatprep.subr.mxu0 0.0
        %646 = vmatpush2.msra.mxu0 0.0
        %647 = vmatprep.subr.mxu0 0.0
        %648 = vmatpush2.msra.mxu0 0.0
        %649 = vmatprep.subr.mxu0 0.0
        %650 = vmatpush2.msra.mxu0 0.0
        %651 = vmatprep.subr.mxu0 0.0
        %652 = vmatpush2.msra.mxu0 0.0
        %653 = vmatprep.subr.mxu0 0.0
        %654 = vmatpush2.msra.mxu0 0.0
        %655 = vmatprep.subr.mxu0 0.0
        %656 = vmatpush2.msra.mxu0 0.0
        %657 = vmatprep.subr.mxu0 0.0
        %658 = vmatpush2.msra.mxu0 0.0
        %659 = vmatprep.subr.mxu0 0.0
        %660 = vmatpush2.msra.mxu0 0.0
        %661 = vmatprep.subr.mxu0 0.0
        %662 = vmatpush2.msra.mxu0 0.0
        %663 = vmatprep.subr.mxu0 0.0
        %664 = vmatpush2.msra.mxu0 0.0
        %665 = vmatprep.subr.mxu0 0.0
        %666 = vmatpush2.msra.mxu0 0.0
        %667 = vmatprep.subr.mxu0 0.0
        %668 = vmatpush2.msra.mxu0 0.0
        %669 = vmatprep.subr.mxu0 0.0
        %670 = vmatpush2.msra.mxu0 0.0
        %671 = vmatprep.mubr.f32.mxu0 0.0
        %672 = vmatmul.mubr.f32.gmra.mxu0 %v605
        %v673 = vpop.f32.mrf.mxu0
        %v674 = vadd.f32 %v600, %v673
        %v675 = vpop.f32.mrf.mxu0
        %v676 = vadd.f32 %v602, %v675
        %677 = vdwg.mxu0
        %v678 = vmax.f32 %v674, 0.0
        %v679 = vmax.f32 %v676, 0.0
        %680 = vst [vmem:[%s335] sm:$0xff] %v678
        %681 = vst [vmem:[%s335 + $0x8] sm:$0xff] %v679
        %s682 = sand.u32 %s187, 1
        %s683 = scalar_lea.sflag [#allocation3], %s682
        %s684 = sand.u32 %s187, 1
        %s685 = smul.addr %s684, 16
        %s686 = scalar_lea.vmem [#allocation2], %s685
        %s687 = sand.u32 %s215, 1
        %s688 = scalar_lea.sflag [#allocation5], %s687
        %s689 = sand.u32 %s215, 1
        %s690 = smul.addr %s689, 16
        %s691 = scalar_lea.vmem [#allocation4], %s690
        // Predicated region
        $region45: #{tpu_custom_call.1} parent=43 // pred_check
          %p692 = pneg %p197
        $region46: #{tpu_custom_call.1} parent=43 // pred_check_branch
          %694 = sbr.rel (%p692) target = $region48
        $region47: #{tpu_custom_call.1} parent=43 // pred_region
          %s695 = smul.u32 2, %s30
          %s697 = ssub.s32 256, 256
          %698 = vsyncadd %s683, %s697
          %s699 = smul.addr %s29, 2
          %s700 = sadd.s32 %s695, %s699
          %s701 = smul.addr %s700, 128
          %s702 = scalar_lea.hbm %s6, %s701
          %s704 = sshll.u32 %s686, 4
          %s705 = int_to_ptr.vmem [resolvable:$true] %s704
          %707 = dma.vmem_to_hbm [thread:$0]  %s705, 256, %s702, %s683
        $region48: #{tpu_custom_call.1} parent=43 // pred_fallthru
          _
        // Predicated region
        $region49: #{tpu_custom_call.1} parent=43 // pred_check
          %p708 = pneg %p225
        $region50: #{tpu_custom_call.1} parent=43 // pred_check_branch
          %710 = sbr.rel (%p708) target = $region52
        $region51: #{tpu_custom_call.1} parent=43 // pred_region
          %s711 = smul.u32 2, %s30
          %s713 = ssub.s32 256, 256
          %714 = vsyncadd %s688, %s713
          %s715 = smul.addr %s29, 2
          %s716 = sadd.s32 %s711, %s715
          %s717 = smul.addr %s716, 128
          %s718 = scalar_lea.hbm %s7, %s717
          %s720 = sshll.u32 %s691, 4
          %s721 = int_to_ptr.vmem [resolvable:$true] %s720
          %723 = dma.vmem_to_hbm [thread:$0]  %s721, 256, %s718, %s688
        $region52: #{tpu_custom_call.1} parent=43 // pred_fallthru
          _
      $region44: #{tpu_custom_call.1} parent=5 // pred_fallthru
        _
      %p724 = scmp.le.s32.totalorder 2, %s20
      // Predicated region
      $region53: #{tpu_custom_call.1} parent=5 // pred_check
        %p725 = pneg %p724
      $region54: #{tpu_custom_call.1} parent=5 // pred_check_branch
        %727 = sbr.rel (%p725) target = $region56
      $region55: #{tpu_custom_call.1} parent=5 // pred_region
        %s728 = ssub.s32 %s20, 2
        // Predicated region
        $region57: #{tpu_custom_call.1} parent=55 // pred_check
          %p729 = pneg %p203
        $region58: #{tpu_custom_call.1} parent=55 // pred_check_branch
          %731 = sbr.rel (%p729) target = $region60
        $region59: #{tpu_custom_call.1} parent=55 // pred_region
          %s732 = sand.u32 %s188, 1
          %s733 = scalar_lea.sflag [#allocation3], %s732
          %s734 = sand.u32 %s188, 1
          %s735 = smul.addr %s734, 16
          %s736 = scalar_lea.vmem [#allocation2], %s735
          %737 = dma.done %s733, 256
        $region60: #{tpu_custom_call.1} parent=55 // pred_fallthru
          _
        // Predicated region
        $region61: #{tpu_custom_call.1} parent=55 // pred_check
          %p738 = pneg %p231
        $region62: #{tpu_custom_call.1} parent=55 // pred_check_branch
          %740 = sbr.rel (%p738) target = $region64
        $region63: #{tpu_custom_call.1} parent=55 // pred_region
          %s741 = sand.u32 %s216, 1
          %s742 = scalar_lea.sflag [#allocation5], %s741
          %s743 = sand.u32 %s216, 1
          %s744 = smul.addr %s743, 16
          %s745 = scalar_lea.vmem [#allocation4], %s744
          %746 = dma.done %s742, 256
        $region64: #{tpu_custom_call.1} parent=55 // pred_fallthru
          _
      $region56: #{tpu_custom_call.1} parent=5 // pred_fallthru
        _
    $region6: #{tpu_custom_call.1} parent=1 // loop_footer
      %s24 = sadd.s32 1, %s20
    $region7: #{tpu_custom_call.1} parent=1 // loop_footer_branch
      %19 = sbr.rel target = $region3
    $region8: #{tpu_custom_call.1} parent=1 // loop_exit
      _
    %747 = vsyncpa [#allocation3], 1
    %s748 = scalar_lea.sflag [#allocation3], 1
    %749 = vsyncpa %s748, 1
    %750 = vsyncpa [#allocation5], 1
    %s751 = scalar_lea.sflag [#allocation5], 1
    %752 = vsyncpa %s751, 1

</llo_original>
